<compile_context>
chip_gen: v7x
topology: tpu7x:2x2x1
jax: 0.10.0
libtpu: 0.0.40
codegen_flags: <defaults>
</compile_context>

<pallas_src>
import functools

import numpy as np
import jax
import jax.numpy as jnp
from jax import lax
from jax.experimental import pallas as pl
from jax.experimental.pallas import tpu as pltpu

_NEG = -1e30        # "effectively -inf" finite sentinel for the masked running max
_PAD_BIAS = -1e9    # score bias injected (via the extra feature) for padded columns


def _round_up(x, m):
    return ((x + m - 1) // m) * m


def _cdiv(a, b):
    return (a + b - 1) // b


def _supcon_tile_kernel(z_ref, zt_ref, yc_ref, yr_ref, dc_ref, dr_ref,
                        agg_ref, bn_ref,
                        m_sc, sd_sc, sy_sc, synd_sc,
                        *, inv_temp, tm, tn):
    i = pl.program_id(0)          # row tile  ("parallel" -> megacore split)
    j = pl.program_id(1)          # col tile  ("arbitrary" reduction, innermost)
    n_groups = tn // 128          # lane groups per column tile

    @pl.when(j == 0)
    def _():
        m_sc[...] = jnp.full(m_sc.shape, _NEG, jnp.float32)
        sd_sc[...] = jnp.zeros(sd_sc.shape, jnp.float32)
        sy_sc[...] = jnp.zeros(sy_sc.shape, jnp.float32)
        synd_sc[...] = jnp.zeros(synd_sc.shape, jnp.float32)

    # Hot path: [tm, D+1] x [D+1, tn] Gram tile on the MXU (bf16 inputs by default,
    # f32 accumulation).  The (D+1)-th feature makes every padded column's score ~ -1e10,
    # so padding never needs a per-element in-range compare below.
    scores = jnp.dot(z_ref[...], zt_ref[...],
                     preferred_element_type=jnp.float32) * inv_temp

    # Label masks (boolean end-to-end).  The diagonal does NOT need removing from
    # same_y: its exp is taken against the drop-masked running max and is exactly 0
    # (the lone all-masked-lane corner case is zeroed by the finalize weighting).
    same_y = yc_ref[...] == yr_ref[...]                          # (tm, tn)
    same_ynd = same_y & (dc_ref[...] != dr_ref[...])

    def accumulate(masked):
        # Online masked LSE with WIDE [tm, 128] per-lane state: per-tile reductions are
        # plain VPU max/add across the lane groups; cross-lane work is deferred to the
        # once-per-row-tile finalize.
        m_old = m_sc[...]
        tile_max = masked[:, 0:128]
        for g in range(1, n_groups):
            tile_max = jnp.maximum(tile_max, masked[:, g * 128:(g + 1) * 128])
        m_new = jnp.maximum(m_old, tile_max)
        alpha = jnp.exp(m_old - m_new)                           # <= 1, finite sentinel

        sd_t = jnp.zeros((tm, 128), jnp.float32)
        sy_t = jnp.zeros((tm, 128), jnp.float32)
        synd_t = jnp.zeros((tm, 128), jnp.float32)
        for g in range(n_groups):
            sl = slice(g * 128, (g + 1) * 128)                   # 128-aligned, no relayout
            e = jnp.exp(masked[:, sl] - m_new)                   # single exp pass / element
            sd_t = sd_t + e
            sy_t = sy_t + jnp.where(same_y[:, sl], e, 0.0)
            synd_t = synd_t + jnp.where(same_ynd[:, sl], e, 0.0)

        m_sc[...] = m_new
        sd_sc[...] = sd_sc[...] * alpha + sd_t
        sy_sc[...] = sy_sc[...] * alpha + sy_t
        synd_sc[...] = synd_sc[...] * alpha + synd_t

    # Diagonal fast path: only tiles that straddle the diagonal pay for the iotas /
    # compare / select that drop self-similarities; interior tiles skip them entirely.
    row0 = i * tm
    col0 = j * tn
    on_diag = (row0 < col0 + tn) & (col0 < row0 + tm)

    @pl.when(on_diag)
    def _():
        ridx = row0 + lax.broadcasted_iota(jnp.int32, (tm, tn), 0)
        cidx = col0 + lax.broadcasted_iota(jnp.int32, (tm, tn), 1)
        accumulate(jnp.where(ridx != cidx, scores, _NEG))

    @pl.when(jnp.logical_not(on_diag))
    def _():
        accumulate(scores)

    @pl.when(j == pl.num_programs(1) - 1)
    def _():
        # Merge the 128 per-lane partial LSEs: 1 cross-lane max + 3 cross-lane sums per
        # ROW tile (instead of per column tile).  Lanes that never saw a valid column
        # have m == sentinel, so their weight w underflows to exactly 0.
        m = m_sc[...]
        gm = jnp.max(m, axis=1, keepdims=True)                   # (tm, 1)
        w = jnp.exp(m - gm)
        sd = jnp.sum(sd_sc[...] * w, axis=1, keepdims=True)
        sy = jnp.sum(sy_sc[...] * w, axis=1, keepdims=True)
        synd = jnp.sum(synd_sc[...] * w, axis=1, keepdims=True)
        lse_d = jnp.log(sd) + gm
        lse_y = jnp.log(sy) + gm
        lse_ynd = jnp.log(synd) + gm
        # agg = LSE_y - LSE_drop, bn_row = LSE_y - LSE_ynd (the reference's row-max and
        # mask_drop scaling cancel analytically).  Invalid rows may produce -inf/NaN
        # here; they are filtered by label-derived validity in the JAX epilogue.
        agg_ref[...] = lse_y - lse_d
        bn_ref[...] = lse_y - lse_ynd


def supcon_loss(z, y, dom_labels, temperature=0.07, base_temperature=0.07,
                block_m=256, block_n=256, matmul_dtype=jnp.bfloat16,
                vmem_limit_bytes=32 * 1024 * 1024):
    """SupCon loss + bottleneck loss (is_logsumexp=True, is_normalized=False,
    is_project=False, bn_conditional=True, bn_flipped=True)."""
    assert block_m % 8 == 0 and block_n % 128 == 0
    B, D = z.shape

    # Lane-aligned tiles; rows and columns are padded independently.
    tn = min(block_n, _round_up(B, 128))
    tm = min(block_m, _round_up(B, 8))
    if tm >= B and B > 128:
        # keep >= 2 row tiles so both v7x TensorCores get work on moderate batches
        tm = _round_up(_cdiv(B, 2), 8)
    bp_r = _round_up(B, tm)
    bp_c = _round_up(B, tn)

    zf = z.astype(jnp.float32)
    # Row operand [bp_r, D+1] with extra feature = 1.0 on real rows.
    zrow = jnp.concatenate([zf, jnp.ones((B, 1), jnp.float32)], axis=1)
    zrow = jnp.pad(zrow, ((0, bp_r - B), (0, 0)))
    # Column operand (pre-transposed) [D+1, bp_c]: extra feature is 0 for real columns
    # and -1e9 for padded columns -> padded scores are hugely negative and their exp is
    # exactly 0 inside the kernel (branch-free padding exclusion).
    col_extra = jnp.where(jnp.arange(bp_c) < B, 0.0, _PAD_BIAS).astype(jnp.float32)
    zcol = jnp.pad(zf, ((0, bp_c - B), (0, 0)))
    zcol = jnp.concatenate([zcol, col_extra[:, None]], axis=1)
    zrow = zrow.astype(matmul_dtype)
    zcolT = zcol.T.astype(matmul_dtype)                          # [D+1, bp_c]

    yi = y.astype(jnp.int32)
    di = dom_labels.astype(jnp.int32)
    # Distinct pad sentinels for rows/cols (belt & suspenders: even on label collision,
    # padded columns contribute exactly 0 and padded rows are sliced away below).
    y_rows = jnp.pad(yi, (0, bp_r - B), constant_values=-1).reshape(bp_r, 1)
    d_rows = jnp.pad(di, (0, bp_r - B), constant_values=-1).reshape(bp_r, 1)
    y_cols = jnp.pad(yi, (0, bp_c - B), constant_values=-2).reshape(1, bp_c)
    d_cols = jnp.pad(di, (0, bp_c - B), constant_values=-2).reshape(1, bp_c)

    kernel = functools.partial(_supcon_tile_kernel,
                               inv_temp=1.0 / float(temperature), tm=tm, tn=tn)
    row_vec = pl.BlockSpec((tm, 1), lambda i, j: (i, 0))
    out_shape = jax.ShapeDtypeStruct((bp_r, 1), jnp.float32)

    agg, bn = pl.pallas_call(
        kernel,
        out_shape=(out_shape, out_shape),
        grid_spec=pltpu.PrefetchScalarGridSpec(
            num_scalar_prefetch=0,
            grid=(bp_r // tm, bp_c // tn),
            in_specs=[
                pl.BlockSpec((tm, D + 1), lambda i, j: (i, 0)),   # z row block
                pl.BlockSpec((D + 1, tn), lambda i, j: (0, j)),   # z.T col block
                pl.BlockSpec((tm, 1), lambda i, j: (i, 0)),       # y   (rows)
                pl.BlockSpec((1, tn), lambda i, j: (0, j)),       # y   (cols)
                pl.BlockSpec((tm, 1), lambda i, j: (i, 0)),       # dom (rows)
                pl.BlockSpec((1, tn), lambda i, j: (0, j)),       # dom (cols)
            ],
            out_specs=(row_vec, row_vec),
            # wide [tm, 128] online-LSE state: running max + 3 masked partial sums
            scratch_shapes=[pltpu.VMEM((tm, 128), jnp.float32)] * 4,
        ),
        compiler_params=pltpu.CompilerParams(
            dimension_semantics=("parallel", "arbitrary"),
            vmem_limit_bytes=vmem_limit_bytes),
    )(zrow, zcolT, y_rows, y_cols, d_rows, d_cols)

    # ---- label-only epilogue: counts / validity / scaling.  The byte-wide O(B^2)
    #      compare fuses into its reduction in XLA and is negligible vs. the O(B^2 D)
    #      kernel work.
    agg = agg[:B, 0]
    bn = bn[:B, 0]
    same_y = yi[:, None] == yi[None, :]
    same_d = di[:, None] == di[None, :]
    count_y = jnp.sum(same_y, axis=1).astype(jnp.float32) - 1.0          # off-diagonal
    count_ynd = jnp.sum(same_y & jnp.logical_not(same_d), axis=1).astype(jnp.float32)
    valid1 = count_y > 0
    valid2 = valid1 & (count_ynd > 0)
    n_valid = jnp.sum(valid1.astype(jnp.float32))                        # filtered batch
    scale = float(temperature) / float(base_temperature)
    loss_rows = -scale * agg / jnp.maximum(count_y, 1.0) * n_valid
    bn_rows = scale * bn

    def finite_mean(x, include):
        incl = include & jnp.isfinite(x)
        cnt = jnp.sum(incl.astype(jnp.float32))
        tot = jnp.sum(jnp.where(incl, x, 0.0))
        return jnp.where(cnt > 0, tot / jnp.maximum(cnt, 1.0), 0.0)

    return finite_mean(loss_rows, valid1), finite_mean(bn_rows, valid2)


# ---------------- pure-numpy reference (mirrors the PyTorch code) ----------------
def _np_lse(x, axis=1, keepdims=False):
    m = np.max(x, axis=axis, keepdims=True)
    m_safe = np.where(np.isfinite(m), m, 0.0)
    s = np.sum(np.exp(x - m_safe), axis=axis, keepdims=True)
    with np.errstate(divide="ignore"):
        out = np.log(s) + m_safe
    return out if keepdims else np.squeeze(out, axis=axis)


def _np_finite_mean(x):
    f = np.isfinite(x)
    return float(x[f].mean()) if f.any() else 0.0


def ref_supcon_np(z, y, dom, temperature=0.07, base_temperature=0.07):
    z = np.asarray(z, np.float32)
    y = np.asarray(y).reshape(-1, 1)
    dom = np.asarray(dom).reshape(-1, 1)
    B = z.shape[0]
    mask_drop = ~np.eye(B, dtype=bool)
    mask_y = (y == y.T) & mask_drop
    mask_d = (dom == dom.T)
    mask_y_n_d = mask_y & ~mask_d
    mask_y_f = mask_y.astype(np.float32)
    mask_drop_f = mask_drop.astype(np.float32)
    mask_ynd_f = mask_y_n_d.astype(np.float32)
    with np.errstate(divide="ignore"):
        log_drop = np.log(mask_drop_f)
        log_y = np.log(mask_y_f)
        log_ynd = np.log(mask_ynd_f)

    outer = z @ z.T
    logits = outer / temperature * mask_drop_f
    logits = logits - logits.max(axis=1, keepdims=True)
    denom = _np_lse(logits + log_drop, axis=1, keepdims=True)
    log_prob = logits - denom

    valid = mask_y_f.sum(1) > 0
    log_prob_v, mask_y_v = log_prob[valid], mask_y_f[valid]
    log_y_v, log_ynd_v = log_y[valid], log_ynd[valid]
    mask_ynd_v, logits_v = mask_ynd_f[valid], logits[valid]
    bs = log_prob_v.shape[0]
    agg = _np_lse(log_prob_v + log_y_v, axis=1) / mask_y_v.sum(1) * bs
    loss = -(temperature / base_temperature) * agg

    valid2 = mask_ynd_v.sum(1) > 0
    logits_2, log_y_2, log_ynd_2 = logits_v[valid2], log_y_v[valid2], log_ynd_v[valid2]
    denom_y = _np_lse(logits_2 + log_y_2, axis=1, keepdims=True)
    log_prob_y = logits_2 - denom_y
    bn = -(temperature / base_temperature) * _np_lse(log_prob_y + log_ynd_2, axis=1)
    return _np_finite_mean(loss), _np_finite_mean(bn)


if __name__ == "__main__":
    key = jax.random.PRNGKey(0)

    # --- small shape: single column tile, diagonal path + padded columns ---
    B, Dm = 8, 32
    z = jax.random.normal(key, (B, Dm), dtype=jnp.float32) * 0.1
    y = jnp.array([0, 0, 1, 1, 0, 1, 2, 2], dtype=jnp.int32)         # class labels
    dom = jnp.array([0, 1, 0, 1, 0, 1, 0, 1], dtype=jnp.int32)       # domain labels
    ref_l, ref_b = ref_supcon_np(np.asarray(z), np.asarray(y), np.asarray(dom))

    f32_fn = jax.jit(functools.partial(supcon_loss, matmul_dtype=jnp.float32))
    l, b = jax.block_until_ready(f32_fn(z, y, dom))                  # exact MXU path
    assert np.allclose(float(l), ref_l, rtol=2e-3, atol=2e-3), (float(l), ref_l)
    assert np.allclose(float(b), ref_b, rtol=2e-3, atol=2e-3), (float(b), ref_b)

    l, b = jax.block_until_ready(jax.jit(supcon_loss)(z, y, dom))    # default bf16 path
    assert np.allclose(float(l), ref_l, rtol=5e-2, atol=5e-2), (float(l), ref_l)
    assert np.allclose(float(b), ref_b, rtol=5e-2, atol=5e-2), (float(b), ref_b)

    # --- multi-tile path: diagonal + interior fast-path tiles + padded rows/cols ---
    B2, D2 = 200, 32
    k1, k2, k3 = jax.random.split(key, 3)
    z2 = jax.random.normal(k1, (B2, D2), dtype=jnp.float32) * 0.1
    y2 = jax.random.randint(k2, (B2,), 0, 4, dtype=jnp.int32)
    d2 = jax.random.randint(k3, (B2,), 0, 3, dtype=jnp.int32)
    ref2_l, ref2_b = ref_supcon_np(np.asarray(z2), np.asarray(y2), np.asarray(d2))

    tiled_f32 = jax.jit(functools.partial(supcon_loss, block_m=64, block_n=128,
                                          matmul_dtype=jnp.float32))
    l2, b2 = jax.block_until_ready(tiled_f32(z2, y2, d2))
    assert np.allclose(float(l2), ref2_l, rtol=2e-3, atol=2e-3), (float(l2), ref2_l)
    assert np.allclose(float(b2), ref2_b, rtol=2e-3, atol=2e-3), (float(b2), ref2_b)

    l2, b2 = jax.block_until_ready(jax.jit(supcon_loss)(z2, y2, d2))  # defaults: bf16, 2 row tiles
    assert np.allclose(float(l2), ref2_l, rtol=5e-2, atol=5e-2), (float(l2), ref2_l)
    assert np.allclose(float(b2), ref2_b, rtol=5e-2, atol=5e-2), (float(b2), ref2_b)

    print("KERNEL_OK")
</pallas_src>

<mosaic_0001>
module attributes {stable_mosaic.version = 11 : i64} {
  func.func @_supcon_tile_kernel(%arg0: i32, %arg1: i32, %arg2: memref<8x33xf32, #tpu.memory_space<vmem>>, %arg3: memref<33x128xf32, #tpu.memory_space<vmem>>, %arg4: memref<8x1xi32, #tpu.memory_space<vmem>>, %arg5: memref<1x128xi32, #tpu.memory_space<vmem>>, %arg6: memref<8x1xi32, #tpu.memory_space<vmem>>, %arg7: memref<1x128xi32, #tpu.memory_space<vmem>>, %arg8: memref<8x1xf32, #tpu.memory_space<vmem>>, %arg9: memref<8x1xf32, #tpu.memory_space<vmem>>, %arg10: memref<8x128xf32, #tpu.memory_space<vmem>>, %arg11: memref<8x128xf32, #tpu.memory_space<vmem>>, %arg12: memref<8x128xf32, #tpu.memory_space<vmem>>, %arg13: memref<8x128xf32, #tpu.memory_space<vmem>>) attributes {dimension_semantics = [#tpu.dimension_semantics<parallel>, #tpu.dimension_semantics<arbitrary>], iteration_bounds = array<i64: 1, 1>, scalar_prefetch = 0 : i64, scratch_operands = 4 : i64, tpu.core_type = #tpu.core_type<tc>, window_params = [{transform_indices = @transform_0, window_bounds = array<i64: 8, 33>}, {transform_indices = @transform_1, window_bounds = array<i64: 33, 128>}, {transform_indices = @transform_2, window_bounds = array<i64: 8, 1>}, {transform_indices = @transform_3, window_bounds = array<i64: 1, 128>}, {transform_indices = @transform_4, window_bounds = array<i64: 8, 1>}, {transform_indices = @transform_5, window_bounds = array<i64: 1, 128>}, {transform_indices = @transform_6, window_bounds = array<i64: 8, 1>}, {transform_indices = @transform_7, window_bounds = array<i64: 8, 1>}]} {
    %c0_i32 = arith.constant 0 : i32
    %0 = arith.cmpi eq, %arg1, %c0_i32 : i32
    %1 = arith.extui %0 : i1 to i32
    %c0_i32_0 = arith.constant 0 : i32
    %2 = arith.cmpi ne, %1, %c0_i32_0 : i32
    scf.if %2 {
      %cst_19 = arith.constant -1.000000e+30 : f32
      %34 = vector.broadcast %cst_19 : f32 to vector<8x128xf32>
      %c0_20 = arith.constant 0 : index
      %c0_21 = arith.constant 0 : index
      %35 = vector.load %arg10[%c0_20, %c0_21] : memref<8x128xf32, #tpu.memory_space<vmem>>, vector<8x128xf32>
      tpu.vector_store %arg10[%c0_20, %c0_21], %34 {strides = array<i32>} : memref<8x128xf32, #tpu.memory_space<vmem>>, vector<8x128xf32>,
      %cst_22 = arith.constant 0.000000e+00 : f32
      %36 = vector.broadcast %cst_22 : f32 to vector<8x128xf32>
      %c0_23 = arith.constant 0 : index
      %c0_24 = arith.constant 0 : index
      %37 = vector.load %arg11[%c0_23, %c0_24] : memref<8x128xf32, #tpu.memory_space<vmem>>, vector<8x128xf32>
      tpu.vector_store %arg11[%c0_23, %c0_24], %36 {strides = array<i32>} : memref<8x128xf32, #tpu.memory_space<vmem>>, vector<8x128xf32>,
      %cst_25 = arith.constant 0.000000e+00 : f32
      %38 = vector.broadcast %cst_25 : f32 to vector<8x128xf32>
      %c0_26 = arith.constant 0 : index
      %c0_27 = arith.constant 0 : index
      %39 = vector.load %arg12[%c0_26, %c0_27] : memref<8x128xf32, #tpu.memory_space<vmem>>, vector<8x128xf32>
      tpu.vector_store %arg12[%c0_26, %c0_27], %38 {strides = array<i32>} : memref<8x128xf32, #tpu.memory_space<vmem>>, vector<8x128xf32>,
      %cst_28 = arith.constant 0.000000e+00 : f32
      %40 = vector.broadcast %cst_28 : f32 to vector<8x128xf32>
      %c0_29 = arith.constant 0 : index
      %c0_30 = arith.constant 0 : index
      %41 = vector.load %arg13[%c0_29, %c0_30] : memref<8x128xf32, #tpu.memory_space<vmem>>, vector<8x128xf32>
      tpu.vector_store %arg13[%c0_29, %c0_30], %40 {strides = array<i32>} : memref<8x128xf32, #tpu.memory_space<vmem>>, vector<8x128xf32>,
    } else {
    }
    %c0 = arith.constant 0 : index
    %c0_1 = arith.constant 0 : index
    %3 = vector.load %arg2[%c0, %c0_1] : memref<8x33xf32, #tpu.memory_space<vmem>>, vector<8x33xf32>
    %c0_2 = arith.constant 0 : index
    %c0_3 = arith.constant 0 : index
    %4 = vector.load %arg3[%c0_2, %c0_3] : memref<33x128xf32, #tpu.memory_space<vmem>>, vector<33x128xf32>
    %cst = arith.constant dense<0.000000e+00> : vector<8x128xf32>
    %5 = tpu.matmul %3, %4, %cst {dimension_numbers = #tpu.dot_dimension_numbers<[1], [0], [0], [1], [0, 0, 1, 1], [], []>} : vector<8x33xf32>, vector<33x128xf32>, vector<8x128xf32> -> vector<8x128xf32>
    %cst_4 = arith.constant 14.2857141 : f32
    %6 = vector.broadcast %cst_4 : f32 to vector<8x128xf32>
    %7 = arith.mulf %5, %6 : vector<8x128xf32>
    %c0_5 = arith.constant 0 : index
    %c0_6 = arith.constant 0 : index
    %8 = vector.load %arg4[%c0_5, %c0_6] : memref<8x1xi32, #tpu.memory_space<vmem>>, vector<8x1xi32>
    %c0_7 = arith.constant 0 : index
    %c0_8 = arith.constant 0 : index
    %9 = vector.load %arg5[%c0_7, %c0_8] : memref<1x128xi32, #tpu.memory_space<vmem>>, vector<1x128xi32>
    %10 = vector.broadcast %8 : vector<8x1xi32> to vector<8x128xi32>
    %11 = vector.broadcast %9 : vector<1x128xi32> to vector<8x128xi32>
    %12 = arith.cmpi eq, %10, %11 : vector<8x128xi32>
    %c0_9 = arith.constant 0 : index
    %c0_10 = arith.constant 0 : index
    %13 = vector.load %arg6[%c0_9, %c0_10] : memref<8x1xi32, #tpu.memory_space<vmem>>, vector<8x1xi32>
    %c0_11 = arith.constant 0 : index
    %c0_12 = arith.constant 0 : index
    %14 = vector.load %arg7[%c0_11, %c0_12] : memref<1x128xi32, #tpu.memory_space<vmem>>, vector<1x128xi32>
    %15 = vector.broadcast %13 : vector<8x1xi32> to vector<8x128xi32>
    %16 = vector.broadcast %14 : vector<1x128xi32> to vector<8x128xi32>
    %17 = arith.cmpi ne, %15, %16 : vector<8x128xi32>
    %18 = arith.andi %12, %17 : vector<8x128xi1>
    %c8_i32 = arith.constant 8 : i32
    %19 = arith.muli %arg0, %c8_i32 : i32
    %c128_i32 = arith.constant 128 : i32
    %20 = arith.muli %arg1, %c128_i32 : i32
    %c128_i32_13 = arith.constant 128 : i32
    %21 = arith.addi %20, %c128_i32_13 : i32
    %22 = arith.cmpi slt, %19, %21 : i32
    %c8_i32_14 = arith.constant 8 : i32
    %23 = arith.addi %19, %c8_i32_14 : i32
    %24 = arith.cmpi slt, %20, %23 : i32
    %25 = arith.andi %22, %24 : i1
    %26 = arith.extui %25 : i1 to i32
    %c0_i32_15 = arith.constant 0 : i32
    %27 = arith.cmpi ne, %26, %c0_i32_15 : i32
    scf.if %27 {
      %34 = tpu.iota {dimensions = array<i32: 0>} : vector<8x128xi32>
      %35 = vector.broadcast %19 : i32 to vector<8x128xi32>
      %36 = arith.addi %35, %34 : vector<8x128xi32>
      %37 = tpu.iota {dimensions = array<i32: 1>} : vector<8x128xi32>
      %38 = vector.broadcast %20 : i32 to vector<8x128xi32>
      %39 = arith.addi %38, %37 : vector<8x128xi32>
      %40 = arith.cmpi ne, %36, %39 : vector<8x128xi32>
      %cst_19 = arith.constant -1.000000e+30 : f32
      %41 = vector.broadcast %cst_19 : f32 to vector<8x128xf32>
      %42 = arith.select %40, %7, %41 : vector<8x128xi1>, vector<8x128xf32>
      %c0_20 = arith.constant 0 : index
      %c0_21 = arith.constant 0 : index
      %43 = vector.load %arg10[%c0_20, %c0_21] : memref<8x128xf32, #tpu.memory_space<vmem>>, vector<8x128xf32>
      %44 = arith.maximumf %43, %42 : vector<8x128xf32>
      %45 = arith.subf %43, %44 : vector<8x128xf32>
      %46 = math.exp %45 : vector<8x128xf32>
      %cst_22 = arith.constant 0.000000e+00 : f32
      %47 = vector.broadcast %cst_22 : f32 to vector<8x128xf32>
      %cst_23 = arith.constant 0.000000e+00 : f32
      %48 = vector.broadcast %cst_23 : f32 to vector<8x128xf32>
      %cst_24 = arith.constant 0.000000e+00 : f32
      %49 = vector.broadcast %cst_24 : f32 to vector<8x128xf32>
      %50 = arith.subf %42, %44 : vector<8x128xf32>
      %51 = math.exp %50 : vector<8x128xf32>
      %52 = arith.addf %47, %51 : vector<8x128xf32>
      %cst_25 = arith.constant 0.000000e+00 : f32
      %53 = vector.broadcast %cst_25 : f32 to vector<8x128xf32>
      %54 = arith.select %12, %51, %53 : vector<8x128xi1>, vector<8x128xf32>
      %55 = arith.addf %48, %54 : vector<8x128xf32>
      %cst_26 = arith.constant 0.000000e+00 : f32
      %56 = vector.broadcast %cst_26 : f32 to vector<8x128xf32>
      %57 = arith.select %18, %51, %56 : vector<8x128xi1>, vector<8x128xf32>
      %58 = arith.addf %49, %57 : vector<8x128xf32>
      %c0_27 = arith.constant 0 : index
      %c0_28 = arith.constant 0 : index
      %59 = vector.load %arg10[%c0_27, %c0_28] : memref<8x128xf32, #tpu.memory_space<vmem>>, vector<8x128xf32>
      tpu.vector_store %arg10[%c0_27, %c0_28], %44 {strides = array<i32>} : memref<8x128xf32, #tpu.memory_space<vmem>>, vector<8x128xf32>,
      %c0_29 = arith.constant 0 : index
      %c0_30 = arith.constant 0 : index
      %60 = vector.load %arg11[%c0_29, %c0_30] : memref<8x128xf32, #tpu.memory_space<vmem>>, vector<8x128xf32>
      %61 = arith.mulf %60, %46 : vector<8x128xf32>
      %62 = arith.addf %61, %52 : vector<8x128xf32>
      %c0_31 = arith.constant 0 : index
      %c0_32 = arith.constant 0 : index
      %63 = vector.load %arg11[%c0_31, %c0_32] : memref<8x128xf32, #tpu.memory_space<vmem>>, vector<8x128xf32>
      tpu.vector_store %arg11[%c0_31, %c0_32], %62 {strides = array<i32>} : memref<8x128xf32, #tpu.memory_space<vmem>>, vector<8x128xf32>,
      %c0_33 = arith.constant 0 : index
      %c0_34 = arith.constant 0 : index
      %64 = vector.load %arg12[%c0_33, %c0_34] : memref<8x128xf32, #tpu.memory_space<vmem>>, vector<8x128xf32>
      %65 = arith.mulf %64, %46 : vector<8x128xf32>
      %66 = arith.addf %65, %55 : vector<8x128xf32>
      %c0_35 = arith.constant 0 : index
      %c0_36 = arith.constant 0 : index
      %67 = vector.load %arg12[%c0_35, %c0_36] : memref<8x128xf32, #tpu.memory_space<vmem>>, vector<8x128xf32>
      tpu.vector_store %arg12[%c0_35, %c0_36], %66 {strides = array<i32>} : memref<8x128xf32, #tpu.memory_space<vmem>>, vector<8x128xf32>,
      %c0_37 = arith.constant 0 : index
      %c0_38 = arith.constant 0 : index
      %68 = vector.load %arg13[%c0_37, %c0_38] : memref<8x128xf32, #tpu.memory_space<vmem>>, vector<8x128xf32>
      %69 = arith.mulf %68, %46 : vector<8x128xf32>
      %70 = arith.addf %69, %58 : vector<8x128xf32>
      %c0_39 = arith.constant 0 : index
      %c0_40 = arith.constant 0 : index
      %71 = vector.load %arg13[%c0_39, %c0_40] : memref<8x128xf32, #tpu.memory_space<vmem>>, vector<8x128xf32>
      tpu.vector_store %arg13[%c0_39, %c0_40], %70 {strides = array<i32>} : memref<8x128xf32, #tpu.memory_space<vmem>>, vector<8x128xf32>,
    } else {
    }
    %true = arith.constant true
    %28 = arith.xori %25, %true : i1
    %29 = arith.extui %28 : i1 to i32
    %c0_i32_16 = arith.constant 0 : i32
    %30 = arith.cmpi ne, %29, %c0_i32_16 : i32
    scf.if %30 {
      %c0_19 = arith.constant 0 : index
      %c0_20 = arith.constant 0 : index
      %34 = vector.load %arg10[%c0_19, %c0_20] : memref<8x128xf32, #tpu.memory_space<vmem>>, vector<8x128xf32>
      %35 = arith.maximumf %34, %7 : vector<8x128xf32>
      %36 = arith.subf %34, %35 : vector<8x128xf32>
      %37 = math.exp %36 : vector<8x128xf32>
      %cst_21 = arith.constant 0.000000e+00 : f32
      %38 = vector.broadcast %cst_21 : f32 to vector<8x128xf32>
      %cst_22 = arith.constant 0.000000e+00 : f32
      %39 = vector.broadcast %cst_22 : f32 to vector<8x128xf32>
      %cst_23 = arith.constant 0.000000e+00 : f32
      %40 = vector.broadcast %cst_23 : f32 to vector<8x128xf32>
      %41 = arith.subf %7, %35 : vector<8x128xf32>
      %42 = math.exp %41 : vector<8x128xf32>
      %43 = arith.addf %38, %42 : vector<8x128xf32>
      %cst_24 = arith.constant 0.000000e+00 : f32
      %44 = vector.broadcast %cst_24 : f32 to vector<8x128xf32>
      %45 = arith.select %12, %42, %44 : vector<8x128xi1>, vector<8x128xf32>
      %46 = arith.addf %39, %45 : vector<8x128xf32>
      %cst_25 = arith.constant 0.000000e+00 : f32
      %47 = vector.broadcast %cst_25 : f32 to vector<8x128xf32>
      %48 = arith.select %18, %42, %47 : vector<8x128xi1>, vector<8x128xf32>
      %49 = arith.addf %40, %48 : vector<8x128xf32>
      %c0_26 = arith.constant 0 : index
      %c0_27 = arith.constant 0 : index
      %50 = vector.load %arg10[%c0_26, %c0_27] : memref<8x128xf32, #tpu.memory_space<vmem>>, vector<8x128xf32>
      tpu.vector_store %arg10[%c0_26, %c0_27], %35 {strides = array<i32>} : memref<8x128xf32, #tpu.memory_space<vmem>>, vector<8x128xf32>,
      %c0_28 = arith.constant 0 : index
      %c0_29 = arith.constant 0 : index
      %51 = vector.load %arg11[%c0_28, %c0_29] : memref<8x128xf32, #tpu.memory_space<vmem>>, vector<8x128xf32>
      %52 = arith.mulf %51, %37 : vector<8x128xf32>
      %53 = arith.addf %52, %43 : vector<8x128xf32>
      %c0_30 = arith.constant 0 : index
      %c0_31 = arith.constant 0 : index
      %54 = vector.load %arg11[%c0_30, %c0_31] : memref<8x128xf32, #tpu.memory_space<vmem>>, vector<8x128xf32>
      tpu.vector_store %arg11[%c0_30, %c0_31], %53 {strides = array<i32>} : memref<8x128xf32, #tpu.memory_space<vmem>>, vector<8x128xf32>,
      %c0_32 = arith.constant 0 : index
      %c0_33 = arith.constant 0 : index
      %55 = vector.load %arg12[%c0_32, %c0_33] : memref<8x128xf32, #tpu.memory_space<vmem>>, vector<8x128xf32>
      %56 = arith.mulf %55, %37 : vector<8x128xf32>
      %57 = arith.addf %56, %46 : vector<8x128xf32>
      %c0_34 = arith.constant 0 : index
      %c0_35 = arith.constant 0 : index
      %58 = vector.load %arg12[%c0_34, %c0_35] : memref<8x128xf32, #tpu.memory_space<vmem>>, vector<8x128xf32>
      tpu.vector_store %arg12[%c0_34, %c0_35], %57 {strides = array<i32>} : memref<8x128xf32, #tpu.memory_space<vmem>>, vector<8x128xf32>,
      %c0_36 = arith.constant 0 : index
      %c0_37 = arith.constant 0 : index
      %59 = vector.load %arg13[%c0_36, %c0_37] : memref<8x128xf32, #tpu.memory_space<vmem>>, vector<8x128xf32>
      %60 = arith.mulf %59, %37 : vector<8x128xf32>
      %61 = arith.addf %60, %49 : vector<8x128xf32>
      %c0_38 = arith.constant 0 : index
      %c0_39 = arith.constant 0 : index
      %62 = vector.load %arg13[%c0_38, %c0_39] : memref<8x128xf32, #tpu.memory_space<vmem>>, vector<8x128xf32>
      tpu.vector_store %arg13[%c0_38, %c0_39], %61 {strides = array<i32>} : memref<8x128xf32, #tpu.memory_space<vmem>>, vector<8x128xf32>,
    } else {
    }
    %c0_i32_17 = arith.constant 0 : i32
    %31 = arith.cmpi eq, %arg1, %c0_i32_17 : i32
    %32 = arith.extui %31 : i1 to i32
    %c0_i32_18 = arith.constant 0 : i32
    %33 = arith.cmpi ne, %32, %c0_i32_18 : i32
    scf.if %33 {
      %c0_19 = arith.constant 0 : index
      %c0_20 = arith.constant 0 : index
      %34 = vector.load %arg10[%c0_19, %c0_20] : memref<8x128xf32, #tpu.memory_space<vmem>>, vector<8x128xf32>
      %cst_21 = arith.constant dense<0xFF800000> : vector<8xf32>
      %35 = vector.multi_reduction <maximumf>, %34, %cst_21 [1] : vector<8x128xf32> to vector<8xf32>
      %36 = vector.shape_cast %35 : vector<8xf32> to vector<8x1xf32>
      %37 = vector.broadcast %36 : vector<8x1xf32> to vector<8x128xf32>
      %38 = arith.subf %34, %37 : vector<8x128xf32>
      %39 = math.exp %38 : vector<8x128xf32>
      %c0_22 = arith.constant 0 : index
      %c0_23 = arith.constant 0 : index
      %40 = vector.load %arg11[%c0_22, %c0_23] : memref<8x128xf32, #tpu.memory_space<vmem>>, vector<8x128xf32>
      %41 = arith.mulf %40, %39 : vector<8x128xf32>
      %cst_24 = arith.constant dense<0.000000e+00> : vector<8xf32>
      %42 = vector.multi_reduction <add>, %41, %cst_24 [1] : vector<8x128xf32> to vector<8xf32>
      %43 = vector.shape_cast %42 : vector<8xf32> to vector<8x1xf32>
      %c0_25 = arith.constant 0 : index
      %c0_26 = arith.constant 0 : index
      %44 = vector.load %arg12[%c0_25, %c0_26] : memref<8x128xf32, #tpu.memory_space<vmem>>, vector<8x128xf32>
      %45 = arith.mulf %44, %39 : vector<8x128xf32>
      %cst_27 = arith.constant dense<0.000000e+00> : vector<8xf32>
      %46 = vector.multi_reduction <add>, %45, %cst_27 [1] : vector<8x128xf32> to vector<8xf32>
      %47 = vector.shape_cast %46 : vector<8xf32> to vector<8x1xf32>
      %c0_28 = arith.constant 0 : index
      %c0_29 = arith.constant 0 : index
      %48 = vector.load %arg13[%c0_28, %c0_29] : memref<8x128xf32, #tpu.memory_space<vmem>>, vector<8x128xf32>
      %49 = arith.mulf %48, %39 : vector<8x128xf32>
      %cst_30 = arith.constant dense<0.000000e+00> : vector<8xf32>
      %50 = vector.multi_reduction <add>, %49, %cst_30 [1] : vector<8x128xf32> to vector<8xf32>
      %51 = vector.shape_cast %50 : vector<8xf32> to vector<8x1xf32>
      %52 = math.log %43 : vector<8x1xf32>
      %53 = arith.addf %52, %36 : vector<8x1xf32>
      %54 = math.log %47 : vector<8x1xf32>
      %55 = arith.addf %54, %36 : vector<8x1xf32>
      %56 = math.log %51 : vector<8x1xf32>
      %57 = arith.addf %56, %36 : vector<8x1xf32>
      %58 = arith.subf %55, %53 : vector<8x1xf32>
      %c0_31 = arith.constant 0 : index
      %c0_32 = arith.constant 0 : index
      %59 = vector.load %arg8[%c0_31, %c0_32] : memref<8x1xf32, #tpu.memory_space<vmem>>, vector<8x1xf32>
      tpu.vector_store %arg8[%c0_31, %c0_32], %58 {strides = array<i32>} : memref<8x1xf32, #tpu.memory_space<vmem>>, vector<8x1xf32>,
      %60 = arith.subf %55, %57 : vector<8x1xf32>
      %c0_33 = arith.constant 0 : index
      %c0_34 = arith.constant 0 : index
      %61 = vector.load %arg9[%c0_33, %c0_34] : memref<8x1xf32, #tpu.memory_space<vmem>>, vector<8x1xf32>
      tpu.vector_store %arg9[%c0_33, %c0_34], %60 {strides = array<i32>} : memref<8x1xf32, #tpu.memory_space<vmem>>, vector<8x1xf32>,
    } else {
    }
    return
  }
  func.func @transform_0(%arg0: i32, %arg1: i32) -> (i32, i32) {
    %c0_i32 = arith.constant 0 : i32
    %c0_i32_0 = arith.constant 0 : i32
    return %arg0, %c0_i32 : i32, i32
  }
  func.func @transform_1(%arg0: i32, %arg1: i32) -> (i32, i32) {
    %c0_i32 = arith.constant 0 : i32
    %c0_i32_0 = arith.constant 0 : i32
    return %c0_i32, %arg1 : i32, i32
  }
  func.func @transform_2(%arg0: i32, %arg1: i32) -> (i32, i32) {
    %c0_i32 = arith.constant 0 : i32
    %c0_i32_0 = arith.constant 0 : i32
    return %arg0, %c0_i32 : i32, i32
  }
  func.func @transform_3(%arg0: i32, %arg1: i32) -> (i32, i32) {
    %c0_i32 = arith.constant 0 : i32
    %c0_i32_0 = arith.constant 0 : i32
    return %c0_i32, %arg1 : i32, i32
  }
  func.func @transform_4(%arg0: i32, %arg1: i32) -> (i32, i32) {
    %c0_i32 = arith.constant 0 : i32
    %c0_i32_0 = arith.constant 0 : i32
    return %arg0, %c0_i32 : i32, i32
  }
  func.func @transform_5(%arg0: i32, %arg1: i32) -> (i32, i32) {
    %c0_i32 = arith.constant 0 : i32
    %c0_i32_0 = arith.constant 0 : i32
    return %c0_i32, %arg1 : i32, i32
  }
  func.func @transform_6(%arg0: i32, %arg1: i32) -> (i32, i32) {
    %c0_i32 = arith.constant 0 : i32
    %c0_i32_0 = arith.constant 0 : i32
    return %arg0, %c0_i32 : i32, i32
  }
  func.func @transform_7(%arg0: i32, %arg1: i32) -> (i32, i32) {
    %c0_i32 = arith.constant 0 : i32
    %c0_i32_0 = arith.constant 0 : i32
    return %arg0, %c0_i32 : i32, i32
  }
}

</mosaic_0001>

<llo_original>
// kernel: supcon_loss.1
$region0: #{supcon_loss.1}
  #allocation0 [shape = 'u32[]', space=smem, size = 0x4, offset = 0x4, fixed_abs, tag = 'smem constant byte address 0x4 - core index']
  #allocation1 [shape = 'u32[144,128]{1,0:T(1,128)}', space=vmem, size = 0x12000, scoped, tag = 'internal scratch']
  #allocation2 [shape = 'f32[8,128]{1,0:T(8,128)}', space=vmem, size = 0x1000, scoped, tag = 'scratch operand']
  #allocation3 [shape = 'f32[8,128]{1,0:T(8,128)}', space=vmem, size = 0x1000, scoped, tag = 'scratch operand']
  #allocation4 [shape = 'f32[8,128]{1,0:T(8,128)}', space=vmem, size = 0x1000, scoped, tag = 'scratch operand']
  #allocation5 [shape = 'f32[8,128]{1,0:T(8,128)}', space=vmem, size = 0x1000, scoped, tag = 'scratch operand']
  %s0 = inlined_call_operand.vmem [shape: f32[8,33], index: 0, kind: input, shape index: {}]
  %s1 = inlined_call_operand.vmem [shape: f32[33,128], index: 1, kind: input, shape index: {}]
  %s2 = inlined_call_operand.vmem [shape: s32[8,1], index: 2, kind: input, shape index: {}]
  %s3 = inlined_call_operand.vmem [shape: s32[1,128], index: 3, kind: input, shape index: {}]
  %s4 = inlined_call_operand.vmem [shape: s32[8,1], index: 4, kind: input, shape index: {}]
  %s5 = inlined_call_operand.vmem [shape: s32[1,128], index: 5, kind: input, shape index: {}]
  %s6 = inlined_call_operand.vmem [shape: f32[8,1], index: 6, kind: output, shape index: {0}]
  %s7 = inlined_call_operand.vmem [shape: f32[8,1], index: 7, kind: output, shape index: {1}]
  %8 = xla_tuple %s6, %s7
  %s9 = sld [smem:[#allocation0]]
  $region58: #{supcon_loss.1} parent=0
    _
  %s11 = ssub.s32 1, %s9
  %s12 = scalar_select 0, %s11, %s9
  // Predicated region
  $region2: #{supcon_loss.1} parent=0 // pred_check
    _
  $region3: #{supcon_loss.1} parent=0 // pred_check_branch
    %14 = sbr.rel (0) target = $region5
  $region4: #{supcon_loss.1} parent=0 // pred_region
    _
  $region5: #{supcon_loss.1} parent=0 // pred_fallthru
    _
  // Predicated region
  $region6: #{supcon_loss.1} parent=0 // pred_check
    _
  $region7: #{supcon_loss.1} parent=0 // pred_check_branch
    %16 = sbr.rel (0) target = $region9
  $region8: #{supcon_loss.1} parent=0 // pred_region
    _
  $region9: #{supcon_loss.1} parent=0 // pred_fallthru
    _
  // Predicated region
  $region10: #{supcon_loss.1} parent=0 // pred_check
    _
  $region11: #{supcon_loss.1} parent=0 // pred_check_branch
    %18 = sbr.rel (0) target = $region13
  $region12: #{supcon_loss.1} parent=0 // pred_region
    _
  $region13: #{supcon_loss.1} parent=0 // pred_fallthru
    _
  // Predicated region
  $region14: #{supcon_loss.1} parent=0 // pred_check
    _
  $region15: #{supcon_loss.1} parent=0 // pred_check_branch
    %20 = sbr.rel (0) target = $region17
  $region16: #{supcon_loss.1} parent=0 // pred_region
    _
  $region17: #{supcon_loss.1} parent=0 // pred_fallthru
    _
  // Predicated region
  $region18: #{supcon_loss.1} parent=0 // pred_check
    _
  $region19: #{supcon_loss.1} parent=0 // pred_check_branch
    %22 = sbr.rel (0) target = $region21
  $region20: #{supcon_loss.1} parent=0 // pred_region
    _
  $region21: #{supcon_loss.1} parent=0 // pred_fallthru
    _
  // Predicated region
  $region22: #{supcon_loss.1} parent=0 // pred_check
    _
  $region23: #{supcon_loss.1} parent=0 // pred_check_branch
    %24 = sbr.rel (0) target = $region25
  $region24: #{supcon_loss.1} parent=0 // pred_region
    _
  $region25: #{supcon_loss.1} parent=0 // pred_fallthru
    _
  %p25 = scmp.eq.s32.totalorder 0, 0
  // Predicated region
  $region26: #{supcon_loss.1} parent=0 // pred_check
    %p26 = pneg %p25
  $region27: #{supcon_loss.1} parent=0 // pred_check_branch
    %28 = sbr.rel (%p26) target = $region29
  $region28: #{supcon_loss.1} parent=0 // pred_region
    %29 = vst [vmem:[#allocation2] sm:$0xff] -1e+30
    %30 = vst [vmem:[#allocation3] sm:$0xff] 0.0
    %31 = vst [vmem:[#allocation4] sm:$0xff] 0.0
    %32 = vst [vmem:[#allocation5] sm:$0xff] 0.0
  $region29: #{supcon_loss.1} parent=0 // pred_fallthru
    _
  %v33 = vld [vmem:[%s0] sm:$0xff]
  %v34 = vld [vmem:[%s1] sm:$0xff]
  %v35 = vld [vmem:[%s1 + $0x8] sm:$0xff]
  %v36 = vld [vmem:[%s1 + $0x10] sm:$0xff]
  %v37 = vld [vmem:[%s1 + $0x18] sm:$0xff]
  %v38 = vld [vmem:[%s1 + $0x20] sm:$0x1]
  %vm39 = vcmask 269312
  %v41 = vsel %vm39, %v33, 0
  %vm43 = vcmask 1040384
  %v45 = vsel %vm43, %v38, 0
  %47 = vmatprep.subr.mxu0 0.0
  %48 = vmatpush1.msra.mxu0 %v34
  %49 = vmatprep.subr.mxu0 0.0
  %50 = vmatpush1.msra.mxu0 %v35
  %51 = vmatprep.subr.mxu0 0.0
  %52 = vmatpush1.msra.mxu0 %v36
  %53 = vmatprep.subr.mxu0 0.0
  %54 = vmatpush1.msra.mxu0 %v37
  %55 = vmatprep.subr.mxu0 0.0
  %56 = vmatpush1.msra.mxu0 %v45
  %57 = vmatprep.subr.mxu0 0.0
  %58 = vmatpush1.msra.mxu0 0.0
  %59 = vmatprep.subr.mxu0 0.0
  %60 = vmatpush1.msra.mxu0 0.0
  %61 = vmatprep.subr.mxu0 0.0
  %62 = vmatpush1.msra.mxu0 0.0
  %63 = vmatprep.subr.mxu0 0.0
  %64 = vmatpush1.msra.mxu0 0.0
  %65 = vmatprep.subr.mxu0 0.0
  %66 = vmatpush1.msra.mxu0 0.0
  %67 = vmatprep.subr.mxu0 0.0
  %68 = vmatpush1.msra.mxu0 0.0
  %69 = vmatprep.subr.mxu0 0.0
  %70 = vmatpush1.msra.mxu0 0.0
  %71 = vmatprep.subr.mxu0 0.0
  %72 = vmatpush1.msra.mxu0 0.0
  %73 = vmatprep.subr.mxu0 0.0
  %74 = vmatpush1.msra.mxu0 0.0
  %75 = vmatprep.subr.mxu0 0.0
  %76 = vmatpush1.msra.mxu0 0.0
  %77 = vmatprep.subr.mxu0 0.0
  %78 = vmatpush1.msra.mxu0 0.0
  %79 = vmatprep.subr.mxu0 0.0
  %80 = vmatpush1.msra.mxu0 0.0
  %81 = vmatprep.subr.mxu0 0.0
  %82 = vmatpush1.msra.mxu0 0.0
  %83 = vmatprep.subr.mxu0 0.0
  %84 = vmatpush1.msra.mxu0 0.0
  %85 = vmatprep.subr.mxu0 0.0
  %86 = vmatpush1.msra.mxu0 0.0
  %87 = vmatprep.subr.mxu0 0.0
  %88 = vmatpush1.msra.mxu0 0.0
  %89 = vmatprep.subr.mxu0 0.0
  %90 = vmatpush1.msra.mxu0 0.0
  %91 = vmatprep.subr.mxu0 0.0
  %92 = vmatpush1.msra.mxu0 0.0
  %93 = vmatprep.subr.mxu0 0.0
  %94 = vmatpush1.msra.mxu0 0.0
  %95 = vmatprep.subr.mxu0 0.0
  %96 = vmatpush1.msra.mxu0 0.0
  %97 = vmatprep.subr.mxu0 0.0
  %98 = vmatpush1.msra.mxu0 0.0
  %99 = vmatprep.subr.mxu0 0.0
  %100 = vmatpush1.msra.mxu0 0.0
  %101 = vmatprep.subr.mxu0 0.0
  %102 = vmatpush1.msra.mxu0 0.0
  %103 = vmatprep.subr.mxu0 0.0
  %104 = vmatpush1.msra.mxu0 0.0
  %105 = vmatprep.subr.mxu0 0.0
  %106 = vmatpush1.msra.mxu0 0.0
  %107 = vmatprep.subr.mxu0 0.0
  %108 = vmatpush1.msra.mxu0 0.0
  %109 = vmatprep.subr.mxu0 0.0
  %110 = vmatpush1.msra.mxu0 0.0
  %111 = vmatprep.mubr.f32.mxu0 0.0
  %112 = vmatmul.mubr.f32.gmra.mrb[0].mxu0 %v41
  %v113 = vpop.f32.mrb[0].mxu0
  %v114 = vadd.f32 0.0, %v113
  %v115 = vpop.f32.mrb[0].mxu0
  %116 = vdwg.mxu0
  %v117 = vmul.f32 %v114, 14.285714
  %v118 = vld [vmem:[%s2] sm:$0xff]
  %v119 = vld [vmem:[%s3] sm:$0x1]
  %120 = vset.pattern.permute.xlu0 0
  %121 = vperm.xlu0 %120, %v118
  %v122 = vpop.permute.xlu0 %121
  %v123 = vlaneseq
  %v124 = vshrl.u32 %v123, 7
  %v125 = vsub.s32 0, %v124
  %v126 = vrot.slane %v119, %v125
  %vm127 = vcmp.eq.s32.totalorder %v122, %v126
  %v128 = vld [vmem:[%s4] sm:$0xff]
  %v129 = vld [vmem:[%s5] sm:$0x1]
  %130 = vset.pattern.permute.xlu0 0
  %131 = vperm.xlu0 %130, %v128
  %v132 = vpop.permute.xlu0 %131
  %v133 = vlaneseq
  %v134 = vshrl.u32 %v133, 7
  %v135 = vsub.s32 0, %v134
  %v136 = vrot.slane %v129, %v135
  %vm137 = vcmp.ne.s32.totalorder %v132, %v136
  %vm138 = vmand %vm127, %vm137
  %s139 = smul.u32 0, 8
  %s140 = smul.u32 0, 128
  %s141 = sadd.s32 %s140, 128
  %p142 = scmp.lt.s32.totalorder %s139, %s141
  %s143 = sadd.s32 %s139, 8
  %p144 = scmp.lt.s32.totalorder %s140, %s143
  %p145 = pnand %p142, %p144
  %p146 = pneg %p145
  // Predicated region
  $region30: #{supcon_loss.1} parent=0 // pred_check
    _
  $region31: #{supcon_loss.1} parent=0 // pred_check_branch
    %148 = sbr.rel (%p145) target = $region33
  $region32: #{supcon_loss.1} parent=0 // pred_region
    %v149 = vlaneseq
    %v150 = vshrl.u32 %v149, 7
    %v151 = vstv %s139
    %v152 = vadd.s32 %v151, %v150
    %v153 = vlaneseq
    %v154 = vand.u32 %v153, 127
    %v155 = vstv %s140
    %v156 = vadd.s32 %v155, %v154
    %vm157 = vcmp.ne.s32.totalorder %v152, %v156
    %v158 = vsel %vm157, %v117, -1e+30
    %v159 = vld [vmem:[#allocation2] sm:$0xff]
    %v160 = vmax.f32 %v159, %v158
    %v161 = vsub.f32 %v159, %v160
    %v162 = vmul.f32 %v161, 1.442695
    %v163 = vpow.pop %v162
    %v164 = vsub.f32 %v158, %v160
    %v165 = vmul.f32 %v164, 1.442695
    %v166 = vpow.pop %v165
    %v167 = vadd.f32 %v166, 0.0
    %v168 = vsel %vm127, %v166, 0.0
    %v169 = vadd.f32 %v168, 0.0
    %v170 = vsel %vm138, %v166, 0.0
    %v171 = vadd.f32 %v170, 0.0
    %172 = vst [vmem:[#allocation2] sm:$0xff] %v160
    %v173 = vld [vmem:[#allocation3] sm:$0xff]
    %v174 = vmul.f32 %v173, %v163
    %v175 = vadd.f32 %v174, %v167
    %176 = vst [vmem:[#allocation3] sm:$0xff] %v175
    %v177 = vld [vmem:[#allocation4] sm:$0xff]
    %v178 = vmul.f32 %v177, %v163
    %v179 = vadd.f32 %v178, %v169
    %180 = vst [vmem:[#allocation4] sm:$0xff] %v179
    %v181 = vld [vmem:[#allocation5] sm:$0xff]
    %v182 = vmul.f32 %v181, %v163
    %v183 = vadd.f32 %v182, %v171
    %184 = vst [vmem:[#allocation5] sm:$0xff] %v183
  $region33: #{supcon_loss.1} parent=0 // pred_fallthru
    _
  %p185 = pneg %p146
  // Predicated region
  $region34: #{supcon_loss.1} parent=0 // pred_check
    _
  $region35: #{supcon_loss.1} parent=0 // pred_check_branch
    %187 = sbr.rel (%p146) target = $region37
  $region36: #{supcon_loss.1} parent=0 // pred_region
    %v188 = vld [vmem:[#allocation2] sm:$0xff]
    %v189 = vmax.f32 %v188, %v117
    %v190 = vsub.f32 %v188, %v189
    %v191 = vmul.f32 %v190, 1.442695
    %v192 = vpow.pop %v191
    %v193 = vsub.f32 %v117, %v189
    %v194 = vmul.f32 %v193, 1.442695
    %v195 = vpow.pop %v194
    %v196 = vadd.f32 %v195, 0.0
    %v197 = vsel %vm127, %v195, 0.0
    %v198 = vadd.f32 %v197, 0.0
    %v199 = vsel %vm138, %v195, 0.0
    %v200 = vadd.f32 %v199, 0.0
    %201 = vst [vmem:[#allocation2] sm:$0xff] %v189
    %v202 = vld [vmem:[#allocation3] sm:$0xff]
    %v203 = vmul.f32 %v202, %v192
    %v204 = vadd.f32 %v203, %v196
    %205 = vst [vmem:[#allocation3] sm:$0xff] %v204
    %v206 = vld [vmem:[#allocation4] sm:$0xff]
    %v207 = vmul.f32 %v206, %v192
    %v208 = vadd.f32 %v207, %v198
    %209 = vst [vmem:[#allocation4] sm:$0xff] %v208
    %v210 = vld [vmem:[#allocation5] sm:$0xff]
    %v211 = vmul.f32 %v210, %v192
    %v212 = vadd.f32 %v211, %v200
    %213 = vst [vmem:[#allocation5] sm:$0xff] %v212
  $region37: #{supcon_loss.1} parent=0 // pred_fallthru
    _
  // Predicated region
  $region38: #{supcon_loss.1} parent=0 // pred_check
    %p214 = pneg %p25
  $region39: #{supcon_loss.1} parent=0 // pred_check_branch
    %216 = sbr.rel (%p214) target = $region41
  $region40: #{supcon_loss.1} parent=0 // pred_region
    %v217 = vld [vmem:[#allocation2] sm:$0xff]
    %218 = vmax.xlane.f32.xlu0 %v217
    %v219 = vpop.xlane.xlu0 %218
    %v220 = vsub.f32 %v217, %v219
    %v221 = vmul.f32 %v220, 1.442695
    %v222 = vpow.pop %v221
    %v223 = vld [vmem:[#allocation3] sm:$0xff]
    %v224 = vmul.f32 %v223, %v222
    %225 = vadd.xlane.f32.xlu0 %v224
    %v226 = vpop.xlane.xlu0 %225
    %v227 = vld [vmem:[#allocation4] sm:$0xff]
    %v228 = vmul.f32 %v227, %v222
    %229 = vadd.xlane.f32.xlu0 %v228
    %v230 = vpop.xlane.xlu0 %229
    %v231 = vld [vmem:[#allocation5] sm:$0xff]
    %v232 = vmul.f32 %v231, %v222
    %233 = vadd.xlane.f32.xlu0 %v232
    %v234 = vpop.xlane.xlu0 %233
    %v235 = vlog2.pop %v226
    %v236 = vmul.f32 %v235, 0.6931472
    %v237 = vadd.f32 %v236, %v219
    %v238 = vlog2.pop %v230
    %v239 = vmul.f32 %v238, 0.6931472
    %v240 = vadd.f32 %v239, %v219
    %v241 = vlog2.pop %v234
    %v242 = vmul.f32 %v241, 0.6931472
    %v243 = vadd.f32 %v242, %v219
    %v244 = vsub.f32 %v240, %v237
    %vm245 = vcmask 7168
    %246 = vst.msk [vmem:[%s6] sm:$0xff] %vm245, %v244
    %v247 = vsub.f32 %v240, %v243
    %248 = vst.msk [vmem:[%s7] sm:$0xff] %vm245, %v247
  $region41: #{supcon_loss.1} parent=0 // pred_fallthru
    _
  // Predicated region
  $region42: #{supcon_loss.1} parent=0 // pred_check
    _
  $region43: #{supcon_loss.1} parent=0 // pred_check_branch
    %250 = sbr.rel (0) target = $region45
  $region44: #{supcon_loss.1} parent=0 // pred_region
    _
  $region45: #{supcon_loss.1} parent=0 // pred_fallthru
    _
  // Predicated region
  $region46: #{supcon_loss.1} parent=0 // pred_check
    _
  $region47: #{supcon_loss.1} parent=0 // pred_check_branch
    %252 = sbr.rel (0) target = $region49
  $region48: #{supcon_loss.1} parent=0 // pred_region
    _
  $region49: #{supcon_loss.1} parent=0 // pred_fallthru
    _
  // Predicated region
  $region50: #{supcon_loss.1} parent=0 // pred_check
    _
  $region51: #{supcon_loss.1} parent=0 // pred_check_branch
    %254 = sbr.rel (0) target = $region53
  $region52: #{supcon_loss.1} parent=0 // pred_region
    _
  $region53: #{supcon_loss.1} parent=0 // pred_fallthru
    _
  // Predicated region
  $region54: #{supcon_loss.1} parent=0 // pred_check
    _
  $region55: #{supcon_loss.1} parent=0 // pred_check_branch
    %256 = sbr.rel (0) target = $region57
  $region56: #{supcon_loss.1} parent=0 // pred_region
    _
  $region57: #{supcon_loss.1} parent=0 // pred_fallthru
    _

</llo_original>
